<compile_context>
chip_gen: v7x
topology: tpu7x:2x2x1
jax: 0.10.0
libtpu: 0.0.40
codegen_flags: <defaults>
</compile_context>

<pallas_src>
import functools
import math

import jax
import jax.numpy as jnp
from jax.experimental import pallas as pl
from jax.experimental.pallas import tpu as pltpu


def _pick_s_tile(S, target=512):
    """Largest multiple-of-8 divisor of S not exceeding `target` (S itself if small)."""
    if S <= target:
        return S
    for ts in range(target, 7, -1):
        if S % ts == 0 and ts % 8 == 0:
            return ts
    return S


def _manager_kernel(cm_ref, eq_ref, hs_ref, wq_ref, bq_ref, wk_ref, bk_ref,
                    wca_ref, wcc_ref, gate_ref, out_ref, *, L):
    """One (batch b, S-tile i) grid step.

    cm_ref  : (TS, H)    cross_modal tile (native dtype)
    eq_ref  : (Sq, H)    extra_query for batch b (resident across S tiles)
    hs_ref  : (L, TS, H) managed-layer hidden states tile
    wq_ref  : (H, H)     q_proj weight^T with 1/sqrt(H) folded in
    bq_ref  : (1, H)     q_proj bias * 1/sqrt(H)  (f32)
    wk_ref  : (H, H)     k_proj weight^T
    bk_ref  : (1, H)     k_proj bias (f32)
    wca_ref : (H, L)     linear_controller weight^T, rows for the attn half
    wcc_ref : (H, L)     linear_controller weight^T, rows for the cross_modal half
    gate_ref: (L, H)     zero_gate (f32)
    out_ref : (TS, H)
    """
    cm = cm_ref[...]
    eq = eq_ref[...]

    # Split q/k projections: native-dtype operands into the MXU, f32 accumulation.
    q = jnp.dot(cm, wq_ref[...], preferred_element_type=jnp.float32) + bq_ref[...]
    k = jnp.dot(eq, wk_ref[...], preferred_element_type=jnp.float32) + bk_ref[...]

    # LayerAttention scores (1/sqrt(H) already folded into q/bq) + exact softmax.
    # TODO(synk): at real scale pad Sq to a multiple of 128 and mask with -inf
    # so the score matmul N dim and the softmax reduction are lane-dense.
    scores = jnp.dot(q, k.T, preferred_element_type=jnp.float32)          # (TS, Sq)
    m = jnp.max(scores, axis=-1, keepdims=True)
    e = jnp.exp(scores - m)
    p = e / jnp.sum(e, axis=-1, keepdims=True)

    # Attention readout; cast probabilities to V dtype for full-rate MXU.
    attn = jnp.dot(p.astype(eq.dtype), eq, preferred_element_type=jnp.float32)

    # linear_controller(cat([attn, cm], -1)) == attn @ Wc_a + cm @ Wc_c:
    # two K=H matmuls, no lane-axis concat temporary.
    sgen = (jnp.dot(attn.astype(cm.dtype), wca_ref[...],
                    preferred_element_type=jnp.float32)
            + jnp.dot(cm, wcc_ref[...],
                      preferred_element_type=jnp.float32))                # (TS, L)

    # aggregate_reps: out = sum_l sgen[:, l] * gate[l] * hs[l].
    # L is small -> static unroll; only one layer of hidden_states live at a time.
    out = jnp.zeros(out_ref.shape, jnp.float32)
    for l in range(L):
        out = out + sgen[:, l:l + 1] * gate_ref[l:l + 1, :] * hs_ref[l]
    out_ref[...] = out.astype(out_ref.dtype)


def prepare_params(params, hidden_size, num_layers, compute_dtype=jnp.float32):
    """One-time weight prep (transpose, 1/sqrt(H) fold, controller split).

    Call once and reuse — keeps the per-call path free of extra XLA ops.
    """
    H, L = hidden_size, num_layers
    inv_sqrt_h = 1.0 / math.sqrt(H)
    wc_t = params["wc"].T                                        # (2H, L), no bias
    return {
        "wq": (params["wq"].T * inv_sqrt_h).astype(compute_dtype),   # score scale folded
        "bq": (params["bq"] * inv_sqrt_h).reshape(1, H).astype(jnp.float32),
        "wk": params["wk"].T.astype(compute_dtype),
        "bk": params["bk"].reshape(1, H).astype(jnp.float32),
        "wc_a": wc_t[:H].astype(compute_dtype),                  # attn half
        "wc_c": wc_t[H:].astype(compute_dtype),                  # cross_modal half
        "gate": params["zero_gate"].reshape(L, H).astype(jnp.float32),
    }


def adaptive_manager_zero_init(hidden_states, cross_modal, extra_query, prepared,
                               *, vmem_limit_bytes=None):
    """query_type == 'cross', eval-mode forward of AdaptiveManagerZeroInit."""
    B, L, S, H = hidden_states.shape
    if extra_query is None:                    # module fallback: use self as query
        extra_query = cross_modal
    Sq = extra_query.shape[1]

    # Grid over (batch, S tiles); weights / bias / gate / extra_query stay resident.
    # TODO(synk): at real LLaVA scale retune the S tile per generation
    # (~256-384 rows on v7x's 64 MiB VMEM, 512-1024 on v5e/v6e), set
    # vmem_limit_bytes accordingly, and consider pipeline_mode=pl.Buffered(3)
    # on the hidden_states BlockSpec if its DMA shows up exposed.
    TS = _pick_s_tile(S)
    grid = (B, S // TS)

    kernel = functools.partial(_manager_kernel, L=L)

    in_specs = [
        pl.BlockSpec((None, TS, H), lambda b, i: (b, i, 0)),        # cross_modal tile
        pl.BlockSpec((None, Sq, H), lambda b, i: (b, 0, 0)),        # extra_query (per batch)
        pl.BlockSpec((None, L, TS, H), lambda b, i: (b, 0, i, 0)),  # hidden_states tile
        pl.BlockSpec((H, H), lambda b, i: (0, 0)),                  # wq^T (scaled)
        pl.BlockSpec((1, H), lambda b, i: (0, 0)),                  # bq (scaled)
        pl.BlockSpec((H, H), lambda b, i: (0, 0)),                  # wk^T
        pl.BlockSpec((1, H), lambda b, i: (0, 0)),                  # bk
        pl.BlockSpec((H, L), lambda b, i: (0, 0)),                  # wc_a
        pl.BlockSpec((H, L), lambda b, i: (0, 0)),                  # wc_c
        pl.BlockSpec((L, H), lambda b, i: (0, 0)),                  # zero_gate
    ]
    out_specs = pl.BlockSpec((None, TS, H), lambda b, i: (b, i, 0))

    return pl.pallas_call(
        kernel,
        out_shape=jax.ShapeDtypeStruct((B, S, H), hidden_states.dtype),
        grid=grid,
        in_specs=in_specs,
        out_specs=out_specs,
        compiler_params=pltpu.CompilerParams(
            # Both grid axes are independent (no carried accumulator) -> lets
            # the v7x dual TensorCores split the work; harmless on v5e/v6e.
            dimension_semantics=("parallel", "parallel"),
            vmem_limit_bytes=vmem_limit_bytes,
        ),
    )(cross_modal, extra_query, hidden_states,
      prepared["wq"], prepared["bq"], prepared["wk"], prepared["bk"],
      prepared["wc_a"], prepared["wc_c"], prepared["gate"])


def _reference(hidden_states, cross_modal, extra_query, params):
    """Pure-JAX mirror of the PyTorch forward (query_type='cross', eval mode)."""
    H = hidden_states.shape[-1]
    q = cross_modal @ params["wq"].T + params["bq"]
    k = extra_query @ params["wk"].T + params["bk"]
    scores = jnp.einsum("bsh,bth->bst", q, k) / math.sqrt(H)
    p = jax.nn.softmax(scores, axis=-1)
    attn = jnp.einsum("bst,bth->bsh", p, extra_query)
    fused = jnp.concatenate([attn, cross_modal], axis=-1)
    sgen = fused @ params["wc"].T                               # (B, S, L)
    layer_scores = jnp.transpose(sgen, (0, 2, 1))[..., None]    # (B, L, S, 1)
    return jnp.sum(layer_scores * params["zero_gate"] * hidden_states, axis=1)


if __name__ == "__main__":
    B, L, S, Sq, H = 2, 4, 8, 8, 32   # batch, num_manage_select_layer, seq, query-seq, hidden

    key = jax.random.PRNGKey(0)
    keys = jax.random.split(key, 8)
    hidden_states = jax.random.normal(keys[0], (B, L, S, H), jnp.float32)
    cross_modal = jax.random.normal(keys[1], (B, S, H), jnp.float32)
    extra_query = jax.random.normal(keys[2], (B, Sq, H), jnp.float32)

    params = {
        "wq": 0.05 * jax.random.normal(keys[3], (H, H), jnp.float32),
        "bq": 0.05 * jax.random.normal(keys[4], (H,), jnp.float32),
        "wk": 0.05 * jax.random.normal(keys[5], (H, H), jnp.float32),
        "bk": 0.05 * jax.random.normal(keys[6], (H,), jnp.float32),
        "wc": 0.05 * jax.random.normal(keys[7], (L, 2 * H), jnp.float32),
        # exact module init: zero_gate = zeros(1, L, 1, H)
        "zero_gate": jnp.zeros((1, L, 1, H), jnp.float32),
    }

    # 1) True module parameters: zero-init gate -> zero output, as in the module.
    prepared = prepare_params(params, H, L)
    out = adaptive_manager_zero_init(hidden_states, cross_modal, extra_query, prepared)
    jax.block_until_ready(out)
    assert out.shape == (B, S, H)
    assert jnp.allclose(out, jnp.zeros_like(out)), "zero-init gate must yield zeros"

    # 2) Validate the full compute path against a pure-JAX reference with a
    #    non-zero gate (so the check is not trivially zero).
    params_nz = dict(params)
    params_nz["zero_gate"] = jax.random.normal(jax.random.PRNGKey(1), (1, L, 1, H),
                                               jnp.float32)
    prepared_nz = prepare_params(params_nz, H, L)
    out_nz = adaptive_manager_zero_init(hidden_states, cross_modal, extra_query, prepared_nz)
    ref_nz = _reference(hidden_states, cross_modal, extra_query, params_nz)
    jax.block_until_ready(out_nz)
    assert jnp.allclose(out_nz, ref_nz, atol=2e-3, rtol=2e-3), "kernel/reference mismatch"

    print("KERNEL_OK")
</pallas_src>

<mosaic_0001>
module attributes {stable_mosaic.version = 11 : i64} {
  func.func @_manager_kernel(%arg0: i32, %arg1: i32, %arg2: memref<1x8x32xf32, #tpu.memory_space<vmem>>, %arg3: memref<1x8x32xf32, #tpu.memory_space<vmem>>, %arg4: memref<1x4x8x32xf32, #tpu.memory_space<vmem>>, %arg5: memref<32x32xf32, #tpu.memory_space<vmem>>, %arg6: memref<1x32xf32, #tpu.memory_space<vmem>>, %arg7: memref<32x32xf32, #tpu.memory_space<vmem>>, %arg8: memref<1x32xf32, #tpu.memory_space<vmem>>, %arg9: memref<32x4xf32, #tpu.memory_space<vmem>>, %arg10: memref<32x4xf32, #tpu.memory_space<vmem>>, %arg11: memref<4x32xf32, #tpu.memory_space<vmem>>, %arg12: memref<1x8x32xf32, #tpu.memory_space<vmem>>) attributes {dimension_semantics = [#tpu.dimension_semantics<parallel>, #tpu.dimension_semantics<parallel>], iteration_bounds = array<i64: 2, 1>, scalar_prefetch = 0 : i64, scratch_operands = 0 : i64, tpu.core_type = #tpu.core_type<tc>, window_params = [{transform_indices = @transform_0, window_bounds = array<i64: 1, 8, 32>}, {transform_indices = @transform_1, window_bounds = array<i64: 1, 8, 32>}, {transform_indices = @transform_2, window_bounds = array<i64: 1, 4, 8, 32>}, {pipeline_mode = #tpu.pipeline_mode<synchronous>, transform_indices = @transform_3, window_bounds = array<i64: 32, 32>}, {pipeline_mode = #tpu.pipeline_mode<synchronous>, transform_indices = @transform_4, window_bounds = array<i64: 1, 32>}, {pipeline_mode = #tpu.pipeline_mode<synchronous>, transform_indices = @transform_5, window_bounds = array<i64: 32, 32>}, {pipeline_mode = #tpu.pipeline_mode<synchronous>, transform_indices = @transform_6, window_bounds = array<i64: 1, 32>}, {pipeline_mode = #tpu.pipeline_mode<synchronous>, transform_indices = @transform_7, window_bounds = array<i64: 32, 4>}, {pipeline_mode = #tpu.pipeline_mode<synchronous>, transform_indices = @transform_8, window_bounds = array<i64: 32, 4>}, {pipeline_mode = #tpu.pipeline_mode<synchronous>, transform_indices = @transform_9, window_bounds = array<i64: 4, 32>}, {transform_indices = @transform_10, window_bounds = array<i64: 1, 8, 32>}]} {
    %c0 = arith.constant 0 : index
    %c0_0 = arith.constant 0 : index
    %c0_1 = arith.constant 0 : index
    %0 = vector.load %arg2[%c0, %c0_0, %c0_1] : memref<1x8x32xf32, #tpu.memory_space<vmem>>, vector<1x8x32xf32>
    %1 = vector.shape_cast %0 : vector<1x8x32xf32> to vector<8x32xf32>
    %c0_2 = arith.constant 0 : index
    %c0_3 = arith.constant 0 : index
    %c0_4 = arith.constant 0 : index
    %2 = vector.load %arg3[%c0_2, %c0_3, %c0_4] : memref<1x8x32xf32, #tpu.memory_space<vmem>>, vector<1x8x32xf32>
    %3 = vector.shape_cast %2 : vector<1x8x32xf32> to vector<8x32xf32>
    %c0_5 = arith.constant 0 : index
    %c0_6 = arith.constant 0 : index
    %4 = vector.load %arg5[%c0_5, %c0_6] : memref<32x32xf32, #tpu.memory_space<vmem>>, vector<32x32xf32>
    %cst = arith.constant dense<0.000000e+00> : vector<8x32xf32>
    %5 = tpu.matmul %1, %4, %cst {dimension_numbers = #tpu.dot_dimension_numbers<[1], [0], [0], [1], [0, 0, 1, 1], [], []>} : vector<8x32xf32>, vector<32x32xf32>, vector<8x32xf32> -> vector<8x32xf32>
    %c0_7 = arith.constant 0 : index
    %c0_8 = arith.constant 0 : index
    %6 = vector.load %arg6[%c0_7, %c0_8] : memref<1x32xf32, #tpu.memory_space<vmem>>, vector<1x32xf32>
    %7 = vector.broadcast %6 : vector<1x32xf32> to vector<8x32xf32>
    %8 = arith.addf %5, %7 : vector<8x32xf32>
    %c0_9 = arith.constant 0 : index
    %c0_10 = arith.constant 0 : index
    %9 = vector.load %arg7[%c0_9, %c0_10] : memref<32x32xf32, #tpu.memory_space<vmem>>, vector<32x32xf32>
    %cst_11 = arith.constant dense<0.000000e+00> : vector<8x32xf32>
    %10 = tpu.matmul %3, %9, %cst_11 {dimension_numbers = #tpu.dot_dimension_numbers<[1], [0], [0], [1], [0, 0, 1, 1], [], []>} : vector<8x32xf32>, vector<32x32xf32>, vector<8x32xf32> -> vector<8x32xf32>
    %c0_12 = arith.constant 0 : index
    %c0_13 = arith.constant 0 : index
    %11 = vector.load %arg8[%c0_12, %c0_13] : memref<1x32xf32, #tpu.memory_space<vmem>>, vector<1x32xf32>
    %12 = vector.broadcast %11 : vector<1x32xf32> to vector<8x32xf32>
    %13 = arith.addf %10, %12 : vector<8x32xf32>
    %14 = tpu.transpose %13, [1, 0] : vector<8x32xf32> -> vector<32x8xf32>
    %cst_14 = arith.constant dense<0.000000e+00> : vector<8x8xf32>
    %15 = tpu.matmul %8, %14, %cst_14 {dimension_numbers = #tpu.dot_dimension_numbers<[1], [0], [0], [1], [0, 0, 1, 1], [], []>} : vector<8x32xf32>, vector<32x8xf32>, vector<8x8xf32> -> vector<8x8xf32>
    %cst_15 = arith.constant dense<0xFF800000> : vector<8xf32>
    %16 = vector.multi_reduction <maximumf>, %15, %cst_15 [1] : vector<8x8xf32> to vector<8xf32>
    %17 = vector.shape_cast %16 : vector<8xf32> to vector<8x1xf32>
    %18 = vector.broadcast %17 : vector<8x1xf32> to vector<8x8xf32>
    %19 = arith.subf %15, %18 : vector<8x8xf32>
    %20 = math.exp %19 : vector<8x8xf32>
    %cst_16 = arith.constant dense<0.000000e+00> : vector<8xf32>
    %21 = vector.multi_reduction <add>, %20, %cst_16 [1] : vector<8x8xf32> to vector<8xf32>
    %22 = vector.shape_cast %21 : vector<8xf32> to vector<8x1xf32>
    %23 = vector.broadcast %22 : vector<8x1xf32> to vector<8x8xf32>
    %24 = arith.divf %20, %23 : vector<8x8xf32>
    %cst_17 = arith.constant dense<0.000000e+00> : vector<8x32xf32>
    %25 = tpu.matmul %24, %3, %cst_17 {dimension_numbers = #tpu.dot_dimension_numbers<[1], [0], [0], [1], [0, 0, 1, 1], [], []>} : vector<8x8xf32>, vector<8x32xf32>, vector<8x32xf32> -> vector<8x32xf32>
    %c0_18 = arith.constant 0 : index
    %c0_19 = arith.constant 0 : index
    %26 = vector.load %arg9[%c0_18, %c0_19] : memref<32x4xf32, #tpu.memory_space<vmem>>, vector<32x4xf32>
    %cst_20 = arith.constant dense<0.000000e+00> : vector<8x4xf32>
    %27 = tpu.matmul %25, %26, %cst_20 {dimension_numbers = #tpu.dot_dimension_numbers<[1], [0], [0], [1], [0, 0, 1, 1], [], []>} : vector<8x32xf32>, vector<32x4xf32>, vector<8x4xf32> -> vector<8x4xf32>
    %c0_21 = arith.constant 0 : index
    %c0_22 = arith.constant 0 : index
    %28 = vector.load %arg10[%c0_21, %c0_22] : memref<32x4xf32, #tpu.memory_space<vmem>>, vector<32x4xf32>
    %cst_23 = arith.constant dense<0.000000e+00> : vector<8x4xf32>
    %29 = tpu.matmul %1, %28, %cst_23 {dimension_numbers = #tpu.dot_dimension_numbers<[1], [0], [0], [1], [0, 0, 1, 1], [], []>} : vector<8x32xf32>, vector<32x4xf32>, vector<8x4xf32> -> vector<8x4xf32>
    %30 = arith.addf %27, %29 : vector<8x4xf32>
    %cst_24 = arith.constant 0.000000e+00 : f32
    %31 = vector.broadcast %cst_24 : f32 to vector<8x32xf32>
    %32 = vector.extract_strided_slice %30 {offsets = [0, 0], sizes = [8, 1], strides = [1, 1]} : vector<8x4xf32> to vector<8x1xf32>
    %c0_25 = arith.constant 0 : index
    %c0_26 = arith.constant 0 : index
    %33 = vector.load %arg11[%c0_25, %c0_26] : memref<4x32xf32, #tpu.memory_space<vmem>>, vector<1x32xf32>
    %34 = vector.broadcast %32 : vector<8x1xf32> to vector<8x32xf32>
    %35 = vector.broadcast %33 : vector<1x32xf32> to vector<8x32xf32>
    %36 = arith.mulf %34, %35 : vector<8x32xf32>
    %c0_27 = arith.constant 0 : index
    %c0_28 = arith.constant 0 : index
    %c0_29 = arith.constant 0 : index
    %c0_30 = arith.constant 0 : index
    %37 = vector.load %arg4[%c0_27, %c0_28, %c0_29, %c0_30] : memref<1x4x8x32xf32, #tpu.memory_space<vmem>>, vector<1x1x8x32xf32>
    %38 = vector.shape_cast %37 : vector<1x1x8x32xf32> to vector<8x32xf32>
    %39 = arith.mulf %36, %38 : vector<8x32xf32>
    %40 = arith.addf %31, %39 : vector<8x32xf32>
    %41 = vector.extract_strided_slice %30 {offsets = [0, 1], sizes = [8, 1], strides = [1, 1]} : vector<8x4xf32> to vector<8x1xf32>
    %c1 = arith.constant 1 : index
    %c0_31 = arith.constant 0 : index
    %42 = vector.load %arg11[%c1, %c0_31] : memref<4x32xf32, #tpu.memory_space<vmem>>, vector<1x32xf32>
    %43 = vector.broadcast %41 : vector<8x1xf32> to vector<8x32xf32>
    %44 = vector.broadcast %42 : vector<1x32xf32> to vector<8x32xf32>
    %45 = arith.mulf %43, %44 : vector<8x32xf32>
    %c0_32 = arith.constant 0 : index
    %c1_33 = arith.constant 1 : index
    %c0_34 = arith.constant 0 : index
    %c0_35 = arith.constant 0 : index
    %46 = vector.load %arg4[%c0_32, %c1_33, %c0_34, %c0_35] : memref<1x4x8x32xf32, #tpu.memory_space<vmem>>, vector<1x1x8x32xf32>
    %47 = vector.shape_cast %46 : vector<1x1x8x32xf32> to vector<8x32xf32>
    %48 = arith.mulf %45, %47 : vector<8x32xf32>
    %49 = arith.addf %40, %48 : vector<8x32xf32>
    %50 = vector.extract_strided_slice %30 {offsets = [0, 2], sizes = [8, 1], strides = [1, 1]} : vector<8x4xf32> to vector<8x1xf32>
    %c2 = arith.constant 2 : index
    %c0_36 = arith.constant 0 : index
    %51 = vector.load %arg11[%c2, %c0_36] : memref<4x32xf32, #tpu.memory_space<vmem>>, vector<1x32xf32>
    %52 = vector.broadcast %50 : vector<8x1xf32> to vector<8x32xf32>
    %53 = vector.broadcast %51 : vector<1x32xf32> to vector<8x32xf32>
    %54 = arith.mulf %52, %53 : vector<8x32xf32>
    %c0_37 = arith.constant 0 : index
    %c2_38 = arith.constant 2 : index
    %c0_39 = arith.constant 0 : index
    %c0_40 = arith.constant 0 : index
    %55 = vector.load %arg4[%c0_37, %c2_38, %c0_39, %c0_40] : memref<1x4x8x32xf32, #tpu.memory_space<vmem>>, vector<1x1x8x32xf32>
    %56 = vector.shape_cast %55 : vector<1x1x8x32xf32> to vector<8x32xf32>
    %57 = arith.mulf %54, %56 : vector<8x32xf32>
    %58 = arith.addf %49, %57 : vector<8x32xf32>
    %59 = vector.extract_strided_slice %30 {offsets = [0, 3], sizes = [8, 1], strides = [1, 1]} : vector<8x4xf32> to vector<8x1xf32>
    %c3 = arith.constant 3 : index
    %c0_41 = arith.constant 0 : index
    %60 = vector.load %arg11[%c3, %c0_41] : memref<4x32xf32, #tpu.memory_space<vmem>>, vector<1x32xf32>
    %61 = vector.broadcast %59 : vector<8x1xf32> to vector<8x32xf32>
    %62 = vector.broadcast %60 : vector<1x32xf32> to vector<8x32xf32>
    %63 = arith.mulf %61, %62 : vector<8x32xf32>
    %c0_42 = arith.constant 0 : index
    %c3_43 = arith.constant 3 : index
    %c0_44 = arith.constant 0 : index
    %c0_45 = arith.constant 0 : index
    %64 = vector.load %arg4[%c0_42, %c3_43, %c0_44, %c0_45] : memref<1x4x8x32xf32, #tpu.memory_space<vmem>>, vector<1x1x8x32xf32>
    %65 = vector.shape_cast %64 : vector<1x1x8x32xf32> to vector<8x32xf32>
    %66 = arith.mulf %63, %65 : vector<8x32xf32>
    %67 = arith.addf %58, %66 : vector<8x32xf32>
    %c0_46 = arith.constant 0 : index
    %c0_47 = arith.constant 0 : index
    %c0_48 = arith.constant 0 : index
    %68 = vector.load %arg12[%c0_46, %c0_47, %c0_48] : memref<1x8x32xf32, #tpu.memory_space<vmem>>, vector<1x8x32xf32>
    %69 = vector.shape_cast %68 : vector<1x8x32xf32> to vector<8x32xf32>
    %70 = vector.shape_cast %67 : vector<8x32xf32> to vector<1x8x32xf32>
    tpu.vector_store %arg12[%c0_46, %c0_47, %c0_48], %70 {strides = array<i32>} : memref<1x8x32xf32, #tpu.memory_space<vmem>>, vector<1x8x32xf32>,
    return
  }
  func.func @transform_0(%arg0: i32, %arg1: i32) -> (i32, i32, i32) {
    %c0_i32 = arith.constant 0 : i32
    %c0_i32_0 = arith.constant 0 : i32
    return %arg0, %arg1, %c0_i32 : i32, i32, i32
  }
  func.func @transform_1(%arg0: i32, %arg1: i32) -> (i32, i32, i32) {
    %c0_i32 = arith.constant 0 : i32
    %c0_i32_0 = arith.constant 0 : i32
    %c0_i32_1 = arith.constant 0 : i32
    return %arg0, %c0_i32, %c0_i32_0 : i32, i32, i32
  }
  func.func @transform_2(%arg0: i32, %arg1: i32) -> (i32, i32, i32, i32) {
    %c0_i32 = arith.constant 0 : i32
    %c0_i32_0 = arith.constant 0 : i32
    %c0_i32_1 = arith.constant 0 : i32
    return %arg0, %c0_i32, %arg1, %c0_i32_0 : i32, i32, i32, i32
  }
  func.func @transform_3(%arg0: i32, %arg1: i32) -> (i32, i32) {
    %c0_i32 = arith.constant 0 : i32
    %c0_i32_0 = arith.constant 0 : i32
    %c0_i32_1 = arith.constant 0 : i32
    return %c0_i32, %c0_i32_0 : i32, i32
  }
  func.func @transform_4(%arg0: i32, %arg1: i32) -> (i32, i32) {
    %c0_i32 = arith.constant 0 : i32
    %c0_i32_0 = arith.constant 0 : i32
    %c0_i32_1 = arith.constant 0 : i32
    return %c0_i32, %c0_i32_0 : i32, i32
  }
  func.func @transform_5(%arg0: i32, %arg1: i32) -> (i32, i32) {
    %c0_i32 = arith.constant 0 : i32
    %c0_i32_0 = arith.constant 0 : i32
    %c0_i32_1 = arith.constant 0 : i32
    return %c0_i32, %c0_i32_0 : i32, i32
  }
  func.func @transform_6(%arg0: i32, %arg1: i32) -> (i32, i32) {
    %c0_i32 = arith.constant 0 : i32
    %c0_i32_0 = arith.constant 0 : i32
    %c0_i32_1 = arith.constant 0 : i32
    return %c0_i32, %c0_i32_0 : i32, i32
  }
  func.func @transform_7(%arg0: i32, %arg1: i32) -> (i32, i32) {
    %c0_i32 = arith.constant 0 : i32
    %c0_i32_0 = arith.constant 0 : i32
    %c0_i32_1 = arith.constant 0 : i32
    return %c0_i32, %c0_i32_0 : i32, i32
  }
  func.func @transform_8(%arg0: i32, %arg1: i32) -> (i32, i32) {
    %c0_i32 = arith.constant 0 : i32
    %c0_i32_0 = arith.constant 0 : i32
    %c0_i32_1 = arith.constant 0 : i32
    return %c0_i32, %c0_i32_0 : i32, i32
  }
  func.func @transform_9(%arg0: i32, %arg1: i32) -> (i32, i32) {
    %c0_i32 = arith.constant 0 : i32
    %c0_i32_0 = arith.constant 0 : i32
    %c0_i32_1 = arith.constant 0 : i32
    return %c0_i32, %c0_i32_0 : i32, i32
  }
  func.func @transform_10(%arg0: i32, %arg1: i32) -> (i32, i32, i32) {
    %c0_i32 = arith.constant 0 : i32
    %c0_i32_0 = arith.constant 0 : i32
    return %arg0, %arg1, %c0_i32 : i32, i32, i32
  }
}

</mosaic_0001>

<llo_original>
// kernel: tpu_custom_call.1
$region0: #{tpu_custom_call.1}
  #allocation0 [shape = 'u32[]', space=smem, size = 0x4, offset = 0x4, fixed_abs, tag = 'smem constant byte address 0x4 - core index']
  #allocation1 [shape = 'u32[144,128]{1,0:T(1,128)}', space=vmem, size = 0x12000, scoped, tag = 'internal scratch']
  %s0 = inlined_call_operand.hbm [shape: f32[2,8,32], index: 0, kind: input, shape index: {}]
  %s1 = inlined_call_operand.hbm [shape: f32[2,8,32], index: 1, kind: input, shape index: {}]
  %s2 = inlined_call_operand.vmem [shape: f32[2,4,8,32], index: 2, kind: input, shape index: {}]
  %s3 = inlined_call_operand.hbm [shape: f32[32,32], index: 3, kind: input, shape index: {}]
  %s4 = inlined_call_operand.vmem [shape: f32[1,32], index: 4, kind: input, shape index: {}]
  %s5 = inlined_call_operand.hbm [shape: f32[32,32], index: 5, kind: input, shape index: {}]
  %s6 = inlined_call_operand.vmem [shape: f32[1,32], index: 6, kind: input, shape index: {}]
  %s7 = inlined_call_operand.vmem [shape: f32[32,4], index: 7, kind: input, shape index: {}]
  %s8 = inlined_call_operand.vmem [shape: f32[32,4], index: 8, kind: input, shape index: {}]
  %s9 = inlined_call_operand.vmem [shape: f32[4,32], index: 9, kind: input, shape index: {}]
  %s10 = inlined_call_operand.hbm [shape: f32[2,8,32], index: 10, kind: output, shape index: {}]
  %s11 = sld [smem:[#allocation0]]
  $region89: #{tpu_custom_call.1} parent=0
    _
  %s13 = ssub.s32 1, %s11
  %s14 = scalar_select 0, %s13, %s11
  $region1: #{tpu_custom_call.1} parent=0
    #allocation2 [shape = 'u8[8192]{0}', space=vmem, size = 0x2000, scoped, tag = 'input window, operand 0']
    #allocation3 [shape = 's32[2]{0}', space=sflag, size = 0x8, scoped, tag = 'scoped memory for tpu_custom_call.1']
    #allocation4 [shape = 's32[2]{0}', space=sflag, size = 0x8, scoped, tag = 'scoped memory for tpu_custom_call.1']
    #allocation5 [shape = 'u8[8192]{0}', space=vmem, size = 0x2000, scoped, tag = 'input window, operand 1']
    #allocation6 [shape = 's32[2]{0}', space=sflag, size = 0x8, scoped, tag = 'scoped memory for tpu_custom_call.1']
    #allocation7 [shape = 'u8[16384]{0}', space=vmem, size = 0x4000, scoped, tag = 'input window, operand 3, single buffered']
    #allocation8 [shape = 'u8[16384]{0}', space=vmem, size = 0x4000, scoped, tag = 'input window, operand 5, single buffered']
    #allocation9 [shape = 's32[1]{0}', space=sflag, size = 0x4, scoped, tag = 'scoped memory for tpu_custom_call.1']
    #allocation10 [shape = 'u8[8192]{0}', space=vmem, size = 0x2000, scoped, tag = 'output window, operand 0']
    %15 = vsyncpa [#allocation3], 0
    %s16 = scalar_lea.sflag [#allocation3], 1
    %17 = vsyncpa %s16, 0
    %18 = vsyncpa [#allocation6], 0
    %s19 = scalar_lea.sflag [#allocation6], 1
    %20 = vsyncpa %s19, 0
    %21 = vsyncpa [#allocation9], 0
    %22 = vsyncpa [#allocation4], 0
    %s23 = scalar_lea.sflag [#allocation4], 1
    %24 = vsyncpa %s23, 0
    loop: start=0, step=1, limit=4
    $region2: #{tpu_custom_call.1} parent=1 // loop_pre_header
      _
    $region3: #{tpu_custom_call.1} parent=1 // loop_header
      %s26 = sphi 0, %s30
      %p27 = scmp.ge.s32.totalorder %s26, 4
      %s33 = sphi 0, %s45
      %s34 = sphi 0, %s41
      %s35 = sphi 0, %s33
      %s36 = sphi 0, %s34
      %s37 = sphi 0, %s35
      %s38 = sphi 0, %s36
      %s50 = sphi 0, %s52
      %s53 = sphi 0, %s50
      %s54 = sphi 0, %s53
      %s70 = sphi 0, %s54
      %s76 = sphi 0, %s78
      %s79 = sphi 0, %s76
      %s80 = sphi 0, %s79
      %s96 = sphi 0, %s80
      %s104 = sphi 0, %s106
      %s107 = sphi 0, %s104
      %s108 = sphi 0, %s107
      %s124 = sphi 0, %s108
      %s128 = sphi 0, %s128
      %s130 = sphi 0, %s128
      %s131 = sphi 0, %s130
      %s145 = sphi 0, %s131
      %s149 = sphi 0, %s149
      %s151 = sphi 0, %s149
      %s152 = sphi 0, %s151
      %s166 = sphi 0, %s152
      %s170 = sphi 0, %s170
      %s172 = sphi 0, %s170
      %s173 = sphi 0, %s172
      %s187 = sphi 0, %s173
      %s191 = sphi 0, %s191
      %s193 = sphi 0, %s191
      %s194 = sphi 0, %s193
      %s208 = sphi 0, %s194
      %s212 = sphi 0, %s212
      %s214 = sphi 0, %s212
      %s215 = sphi 0, %s214
      %s229 = sphi 0, %s215
      %s233 = sphi 0, %s233
      %s235 = sphi 0, %s233
      %s236 = sphi 0, %s235
      %s250 = sphi 0, %s236
      %s254 = sphi 0, %s254
      %s256 = sphi 0, %s254
      %s257 = sphi 0, %s256
      %s271 = sphi 0, %s257
      %s279 = sphi 0, %s281
      %s282 = sphi 0, %s279
      %s283 = sphi 0, %s282
      %s299 = sphi 0, %s283
    $region4: #{tpu_custom_call.1} parent=1 // loop_header_branch
      %29 = sbr.rel (%p27) target = $region8
    $region5: #{tpu_custom_call.1} parent=1 // loop_body
      %s31 = ssub.s32 %s26, 1
      %s32 = ssub.s32 %s26, 2
      %s39 = sadd.s32 1, %s34
      %p40 = scmp.ge.s32.totalorder %s39, 1
      %s41 = scalar_select %p40, 0, %s39
      %s42 = sadd.s32 1, %s33
      %s43 = scalar_select %p40, %s42, %s33
      %p44 = scmp.ge.s32.totalorder %s43, 2
      %s45 = scalar_select %p44, 0, %s43
      %s46 = ssub.s32 %s33, %s45
      %s47 = ssub.s32 %s34, %s41
      %s48 = sor.u32 %s46, %s47
      %p49 = scmp.eq.s32.totalorder %s48, 0
      %s51 = sadd.s32 %s50, 1
      %s52 = scalar_select %p49, %s50, %s51
      %p55 = pneg %p49
      %p56 = scmp.eq.s32.totalorder %s26, 1
      %p57 = por %p55, %p56
      %p58 = scmp.ne.s32.totalorder %s50, %s53
      %p59 = scmp.eq.s32.totalorder %s26, 0
      %p60 = por %p58, %p59
      %p61 = scmp.ne.s32.totalorder %s50, %s53
      %p62 = scmp.eq.s32.totalorder %s31, 1
      %p63 = por %p61, %p62
      %p64 = scmp.ne.s32.totalorder %s53, %s54
      %p65 = scmp.eq.s32.totalorder %s31, 0
      %p66 = por %p64, %p65
      %p67 = scmp.ne.s32.totalorder %s53, %s54
      %p68 = scmp.eq.s32.totalorder %s32, 1
      %p69 = por %p67, %p68
      %p71 = scmp.ne.s32.totalorder %s54, %s70
      %p72 = scmp.eq.s32.totalorder %s32, 0
      %p73 = por %p71, %p72
      %s74 = ssub.s32 %s33, %s45
      %p75 = scmp.eq.s32.totalorder %s74, 0
      %s77 = sadd.s32 %s76, 1
      %s78 = scalar_select %p75, %s76, %s77
      %p81 = pneg %p75
      %p82 = scmp.eq.s32.totalorder %s26, 1
      %p83 = por %p81, %p82
      %p84 = scmp.ne.s32.totalorder %s76, %s79
      %p85 = scmp.eq.s32.totalorder %s26, 0
      %p86 = por %p84, %p85
      %p87 = scmp.ne.s32.totalorder %s76, %s79
      %p88 = scmp.eq.s32.totalorder %s31, 1
      %p89 = por %p87, %p88
      %p90 = scmp.ne.s32.totalorder %s79, %s80
      %p91 = scmp.eq.s32.totalorder %s31, 0
      %p92 = por %p90, %p91
      %p93 = scmp.ne.s32.totalorder %s79, %s80
      %p94 = scmp.eq.s32.totalorder %s32, 1
      %p95 = por %p93, %p94
      %p97 = scmp.ne.s32.totalorder %s80, %s96
      %p98 = scmp.eq.s32.totalorder %s32, 0
      %p99 = por %p97, %p98
      %s100 = ssub.s32 %s33, %s45
      %s101 = ssub.s32 %s34, %s41
      %s102 = sor.u32 %s100, %s101
      %p103 = scmp.eq.s32.totalorder %s102, 0
      %s105 = sadd.s32 %s104, 1
      %s106 = scalar_select %p103, %s104, %s105
      %p109 = pneg %p103
      %p110 = scmp.eq.s32.totalorder %s26, 1
      %p111 = por %p109, %p110
      %p112 = scmp.ne.s32.totalorder %s104, %s107
      %p113 = scmp.eq.s32.totalorder %s26, 0
      %p114 = por %p112, %p113
      %p115 = scmp.ne.s32.totalorder %s104, %s107
      %p116 = scmp.eq.s32.totalorder %s31, 1
      %p117 = por %p115, %p116
      %p118 = scmp.ne.s32.totalorder %s107, %s108
      %p119 = scmp.eq.s32.totalorder %s31, 0
      %p120 = por %p118, %p119
      %p121 = scmp.ne.s32.totalorder %s107, %s108
      %p122 = scmp.eq.s32.totalorder %s32, 1
      %p123 = por %p121, %p122
      %p125 = scmp.ne.s32.totalorder %s108, %s124
      %p126 = scmp.eq.s32.totalorder %s32, 0
      %p127 = por %p125, %p126
      %s129 = sadd.s32 %s128, 1
      %p132 = scmp.eq.s32.totalorder %s26, 1
      %p133 = scmp.ne.s32.totalorder %s128, %s130
      %p134 = scmp.eq.s32.totalorder %s26, 0
      %p135 = por %p133, %p134
      %p136 = scmp.ne.s32.totalorder %s128, %s130
      %p137 = scmp.eq.s32.totalorder %s31, 1
      %p138 = por %p136, %p137
      %p139 = scmp.ne.s32.totalorder %s130, %s131
      %p140 = scmp.eq.s32.totalorder %s31, 0
      %p141 = por %p139, %p140
      %p142 = scmp.ne.s32.totalorder %s130, %s131
      %p143 = scmp.eq.s32.totalorder %s32, 1
      %p144 = por %p142, %p143
      %p146 = scmp.ne.s32.totalorder %s131, %s145
      %p147 = scmp.eq.s32.totalorder %s32, 0
      %p148 = por %p146, %p147
      %s150 = sadd.s32 %s149, 1
      %p153 = scmp.eq.s32.totalorder %s26, 1
      %p154 = scmp.ne.s32.totalorder %s149, %s151
      %p155 = scmp.eq.s32.totalorder %s26, 0
      %p156 = por %p154, %p155
      %p157 = scmp.ne.s32.totalorder %s149, %s151
      %p158 = scmp.eq.s32.totalorder %s31, 1
      %p159 = por %p157, %p158
      %p160 = scmp.ne.s32.totalorder %s151, %s152
      %p161 = scmp.eq.s32.totalorder %s31, 0
      %p162 = por %p160, %p161
      %p163 = scmp.ne.s32.totalorder %s151, %s152
      %p164 = scmp.eq.s32.totalorder %s32, 1
      %p165 = por %p163, %p164
      %p167 = scmp.ne.s32.totalorder %s152, %s166
      %p168 = scmp.eq.s32.totalorder %s32, 0
      %p169 = por %p167, %p168
      %s171 = sadd.s32 %s170, 1
      %p174 = scmp.eq.s32.totalorder %s26, 1
      %p175 = scmp.ne.s32.totalorder %s170, %s172
      %p176 = scmp.eq.s32.totalorder %s26, 0
      %p177 = por %p175, %p176
      %p178 = scmp.ne.s32.totalorder %s170, %s172
      %p179 = scmp.eq.s32.totalorder %s31, 1
      %p180 = por %p178, %p179
      %p181 = scmp.ne.s32.totalorder %s172, %s173
      %p182 = scmp.eq.s32.totalorder %s31, 0
      %p183 = por %p181, %p182
      %p184 = scmp.ne.s32.totalorder %s172, %s173
      %p185 = scmp.eq.s32.totalorder %s32, 1
      %p186 = por %p184, %p185
      %p188 = scmp.ne.s32.totalorder %s173, %s187
      %p189 = scmp.eq.s32.totalorder %s32, 0
      %p190 = por %p188, %p189
      %s192 = sadd.s32 %s191, 1
      %p195 = scmp.eq.s32.totalorder %s26, 1
      %p196 = scmp.ne.s32.totalorder %s191, %s193
      %p197 = scmp.eq.s32.totalorder %s26, 0
      %p198 = por %p196, %p197
      %p199 = scmp.ne.s32.totalorder %s191, %s193
      %p200 = scmp.eq.s32.totalorder %s31, 1
      %p201 = por %p199, %p200
      %p202 = scmp.ne.s32.totalorder %s193, %s194
      %p203 = scmp.eq.s32.totalorder %s31, 0
      %p204 = por %p202, %p203
      %p205 = scmp.ne.s32.totalorder %s193, %s194
      %p206 = scmp.eq.s32.totalorder %s32, 1
      %p207 = por %p205, %p206
      %p209 = scmp.ne.s32.totalorder %s194, %s208
      %p210 = scmp.eq.s32.totalorder %s32, 0
      %p211 = por %p209, %p210
      %s213 = sadd.s32 %s212, 1
      %p216 = scmp.eq.s32.totalorder %s26, 1
      %p217 = scmp.ne.s32.totalorder %s212, %s214
      %p218 = scmp.eq.s32.totalorder %s26, 0
      %p219 = por %p217, %p218
      %p220 = scmp.ne.s32.totalorder %s212, %s214
      %p221 = scmp.eq.s32.totalorder %s31, 1
      %p222 = por %p220, %p221
      %p223 = scmp.ne.s32.totalorder %s214, %s215
      %p224 = scmp.eq.s32.totalorder %s31, 0
      %p225 = por %p223, %p224
      %p226 = scmp.ne.s32.totalorder %s214, %s215
      %p227 = scmp.eq.s32.totalorder %s32, 1
      %p228 = por %p226, %p227
      %p230 = scmp.ne.s32.totalorder %s215, %s229
      %p231 = scmp.eq.s32.totalorder %s32, 0
      %p232 = por %p230, %p231
      %s234 = sadd.s32 %s233, 1
      %p237 = scmp.eq.s32.totalorder %s26, 1
      %p238 = scmp.ne.s32.totalorder %s233, %s235
      %p239 = scmp.eq.s32.totalorder %s26, 0
      %p240 = por %p238, %p239
      %p241 = scmp.ne.s32.totalorder %s233, %s235
      %p242 = scmp.eq.s32.totalorder %s31, 1
      %p243 = por %p241, %p242
      %p244 = scmp.ne.s32.totalorder %s235, %s236
      %p245 = scmp.eq.s32.totalorder %s31, 0
      %p246 = por %p244, %p245
      %p247 = scmp.ne.s32.totalorder %s235, %s236
      %p248 = scmp.eq.s32.totalorder %s32, 1
      %p249 = por %p247, %p248
      %p251 = scmp.ne.s32.totalorder %s236, %s250
      %p252 = scmp.eq.s32.totalorder %s32, 0
      %p253 = por %p251, %p252
      %s255 = sadd.s32 %s254, 1
      %p258 = scmp.eq.s32.totalorder %s26, 1
      %p259 = scmp.ne.s32.totalorder %s254, %s256
      %p260 = scmp.eq.s32.totalorder %s26, 0
      %p261 = por %p259, %p260
      %p262 = scmp.ne.s32.totalorder %s254, %s256
      %p263 = scmp.eq.s32.totalorder %s31, 1
      %p264 = por %p262, %p263
      %p265 = scmp.ne.s32.totalorder %s256, %s257
      %p266 = scmp.eq.s32.totalorder %s31, 0
      %p267 = por %p265, %p266
      %p268 = scmp.ne.s32.totalorder %s256, %s257
      %p269 = scmp.eq.s32.totalorder %s32, 1
      %p270 = por %p268, %p269
      %p272 = scmp.ne.s32.totalorder %s257, %s271
      %p273 = scmp.eq.s32.totalorder %s32, 0
      %p274 = por %p272, %p273
      %s275 = ssub.s32 %s33, %s45
      %s276 = ssub.s32 %s34, %s41
      %s277 = sor.u32 %s275, %s276
      %p278 = scmp.eq.s32.totalorder %s277, 0
      %s280 = sadd.s32 %s279, 1
      %s281 = scalar_select %p278, %s279, %s280
      %p284 = pneg %p278
      %p285 = scmp.eq.s32.totalorder %s26, 1
      %p286 = por %p284, %p285
      %p287 = scmp.ne.s32.totalorder %s279, %s282
      %p288 = scmp.eq.s32.totalorder %s26, 0
      %p289 = por %p287, %p288
      %p290 = scmp.ne.s32.totalorder %s279, %s282
      %p291 = scmp.eq.s32.totalorder %s31, 1
      %p292 = por %p290, %p291
      %p293 = scmp.ne.s32.totalorder %s282, %s283
      %p294 = scmp.eq.s32.totalorder %s31, 0
      %p295 = por %p293, %p294
      %p296 = scmp.ne.s32.totalorder %s282, %s283
      %p297 = scmp.eq.s32.totalorder %s32, 1
      %p298 = por %p296, %p297
      %p300 = scmp.ne.s32.totalorder %s283, %s299
      %p301 = scmp.eq.s32.totalorder %s32, 0
      %p302 = por %p300, %p301
      %p303 = scmp.le.s32.totalorder 1, %s26
      %p304 = scmp.lt.s32.totalorder %s26, 3
      %p305 = pnand %p303, %p304
      %p306 = pneg %p305
      // Predicated region
      $region9: #{tpu_custom_call.1} parent=5 // pred_check
        _
      $region10: #{tpu_custom_call.1} parent=5 // pred_check_branch
        %308 = sbr.rel (%p305) target = $region12
      $region11: #{tpu_custom_call.1} parent=5 // pred_region
        %s309 = ssub.s32 %s26, 1
        // Predicated region
        $region13: #{tpu_custom_call.1} parent=11 // pred_check
          %p310 = pneg %p141
        $region14: #{tpu_custom_call.1} parent=11 // pred_check_branch
          %312 = sbr.rel (%p310) target = $region16
        $region15: #{tpu_custom_call.1} parent=11 // pred_region
          %s314 = ssub.s32 512, 512
          %315 = vsyncadd [#allocation6], %s314
          %s316 = sshll.u32 [#allocation7], 4
          %s317 = int_to_ptr.vmem [resolvable:$true] %s316
          %322 = dma.hbm_to_vmem [thread:$0]  %s3, 512, %s317, [#allocation6], 128, 128, 8
        $region16: #{tpu_custom_call.1} parent=11 // pred_fallthru
          _
        // Predicated region
        $region17: #{tpu_custom_call.1} parent=11 // pred_check
          %p323 = pneg %p162
        $region18: #{tpu_custom_call.1} parent=11 // pred_check_branch
          %325 = sbr.rel (%p323) target = $region20
        $region19: #{tpu_custom_call.1} parent=11 // pred_region
          _
        $region20: #{tpu_custom_call.1} parent=11 // pred_fallthru
          _
        // Predicated region
        $region21: #{tpu_custom_call.1} parent=11 // pred_check
          %p326 = pneg %p183
        $region22: #{tpu_custom_call.1} parent=11 // pred_check_branch
          %328 = sbr.rel (%p326) target = $region24
        $region23: #{tpu_custom_call.1} parent=11 // pred_region
          %s330 = ssub.s32 512, 512
          %331 = vsyncadd [#allocation9], %s330
          %s332 = sshll.u32 [#allocation8], 4
          %s333 = int_to_ptr.vmem [resolvable:$true] %s332
          %338 = dma.hbm_to_vmem [thread:$0]  %s5, 512, %s333, [#allocation9], 128, 128, 8
        $region24: #{tpu_custom_call.1} parent=11 // pred_fallthru
          _
        // Predicated region
        $region25: #{tpu_custom_call.1} parent=11 // pred_check
          %p339 = pneg %p204
        $region26: #{tpu_custom_call.1} parent=11 // pred_check_branch
          %341 = sbr.rel (%p339) target = $region28
        $region27: #{tpu_custom_call.1} parent=11 // pred_region
          _
        $region28: #{tpu_custom_call.1} parent=11 // pred_fallthru
          _
        // Predicated region
        $region29: #{tpu_custom_call.1} parent=11 // pred_check
          %p342 = pneg %p225
        $region30: #{tpu_custom_call.1} parent=11 // pred_check_branch
          %344 = sbr.rel (%p342) target = $region32
        $region31: #{tpu_custom_call.1} parent=11 // pred_region
          _
        $region32: #{tpu_custom_call.1} parent=11 // pred_fallthru
          _
        // Predicated region
        $region33: #{tpu_custom_call.1} parent=11 // pred_check
          %p345 = pneg %p246
        $region34: #{tpu_custom_call.1} parent=11 // pred_check_branch
          %347 = sbr.rel (%p345) target = $region36
        $region35: #{tpu_custom_call.1} parent=11 // pred_region
          _
        $region36: #{tpu_custom_call.1} parent=11 // pred_fallthru
          _
        // Predicated region
        $region37: #{tpu_custom_call.1} parent=11 // pred_check
          %p348 = pneg %p267
        $region38: #{tpu_custom_call.1} parent=11 // pred_check_branch
          %350 = sbr.rel (%p348) target = $region40
        $region39: #{tpu_custom_call.1} parent=11 // pred_region
          _
        $region40: #{tpu_custom_call.1} parent=11 // pred_fallthru
          _
      $region12: #{tpu_custom_call.1} parent=5 // pred_fallthru
        _
      %p351 = scmp.lt.s32.totalorder %s26, 2
      // Predicated region
      $region41: #{tpu_custom_call.1} parent=5 // pred_check
        %p352 = pneg %p351
      $region42: #{tpu_custom_call.1} parent=5 // pred_check_branch
        %354 = sbr.rel (%p352) target = $region44
      $region43: #{tpu_custom_call.1} parent=5 // pred_region
        // Predicated region
        $region45: #{tpu_custom_call.1} parent=43 // pred_check
          %p355 = pneg %p60
        $region46: #{tpu_custom_call.1} parent=43 // pred_check_branch
          %357 = sbr.rel (%p355) target = $region48
        $region47: #{tpu_custom_call.1} parent=43 // pred_region
          %s358 = sand.u32 %s50, 1
          %s359 = scalar_lea.sflag [#allocation3], %s358
          %s360 = sand.u32 %s50, 1
          %s361 = smul.addr %s360, 8
          %s362 = scalar_lea.vmem [#allocation2], %s361
          %s364 = ssub.s32 128, 128
          %365 = vsyncadd %s359, %s364
          %s366 = sadd.s32 %s34, %s33
          %s367 = smul.addr %s366, 128
          %s368 = scalar_lea.hbm %s0, %s367
          %s370 = sshll.u32 %s362, 4
          %s371 = int_to_ptr.vmem [resolvable:$true] %s370
          %373 = dma.hbm_to_vmem [thread:$0]  %s368, 128, %s371, %s359
        $region48: #{tpu_custom_call.1} parent=43 // pred_fallthru
          _
        // Predicated region
        $region49: #{tpu_custom_call.1} parent=43 // pred_check
          %p374 = pneg %p86
        $region50: #{tpu_custom_call.1} parent=43 // pred_check_branch
          %376 = sbr.rel (%p374) target = $region52
        $region51: #{tpu_custom_call.1} parent=43 // pred_region
          %s377 = sand.u32 %s26, 1
          %s378 = scalar_lea.sflag [#allocation6], %s377
          %s379 = sand.u32 %s76, 1
          %s380 = smul.addr %s379, 8
          %s381 = scalar_lea.vmem [#allocation5], %s380
          %s383 = ssub.s32 128, 128
          %384 = vsyncadd %s378, %s383
          %s385 = smul.addr %s33, 128
          %s386 = scalar_lea.hbm %s1, %s385
          %s388 = sshll.u32 %s381, 4
          %s389 = int_to_ptr.vmem [resolvable:$true] %s388
          %391 = dma.hbm_to_vmem [thread:$0]  %s386, 128, %s389, %s378
        $region52: #{tpu_custom_call.1} parent=43 // pred_fallthru
          _
        // Predicated region
        $region53: #{tpu_custom_call.1} parent=43 // pred_check
          %p392 = pneg %p114
        $region54: #{tpu_custom_call.1} parent=43 // pred_check_branch
          %394 = sbr.rel (%p392) target = $region56
        $region55: #{tpu_custom_call.1} parent=43 // pred_region
          %p395 = scmp.lt.s32.totalorder %s33, 1
          %s396 = scalar_select %p395, %s33, 1
          %p397 = scmp.lt.s32.totalorder %s34, 0
          %s398 = scalar_select %p397, %s34, 0
          %s399 = smul.addr %s396, 4
          %s400 = sadd.s32 %s398, %s399
          %s401 = smul.addr %s400, 8
          %s402 = scalar_lea.vmem %s2, %s401
        $region56: #{tpu_custom_call.1} parent=43 // pred_fallthru
          _
      $region44: #{tpu_custom_call.1} parent=5 // pred_fallthru
        _
      %p403 = scmp.le.s32.totalorder 1, %s26
      %p404 = scmp.lt.s32.totalorder %s26, 3
      %p405 = pnand %p403, %p404
      %p406 = pneg %p405
      // Predicated region
      $region57: #{tpu_custom_call.1} parent=5 // pred_check
        _
      $region58: #{tpu_custom_call.1} parent=5 // pred_check_branch
        %408 = sbr.rel (%p405) target = $region60
      $region59: #{tpu_custom_call.1} parent=5 // pred_region
        %s409 = ssub.s32 %s26, 1
        %s410 = sand.u32 %s53, 1
        %s411 = scalar_lea.sflag [#allocation3], %s410
        %s412 = sand.u32 %s53, 1
        %s413 = smul.addr %s412, 8
        %s414 = scalar_lea.vmem [#allocation2], %s413
        // Predicated region
        $region61: #{tpu_custom_call.1} parent=59 // pred_check
          %p415 = pneg %p66
        $region62: #{tpu_custom_call.1} parent=59 // pred_check_branch
          %417 = sbr.rel (%p415) target = $region64
        $region63: #{tpu_custom_call.1} parent=59 // pred_region
          %418 = dma.done %s411, 128
        $region64: #{tpu_custom_call.1} parent=59 // pred_fallthru
          _
        %s419 = sand.u32 %s31, 1
        %s420 = scalar_lea.sflag [#allocation6], %s419
        %s421 = sand.u32 %s79, 1
        %s422 = smul.addr %s421, 8
        %s423 = scalar_lea.vmem [#allocation5], %s422
        // Predicated region
        $region65: #{tpu_custom_call.1} parent=59 // pred_check
          %p424 = pneg %p92
        $region66: #{tpu_custom_call.1} parent=59 // pred_check_branch
          %426 = sbr.rel (%p424) target = $region68
        $region67: #{tpu_custom_call.1} parent=59 // pred_region
          %427 = dma.done %s420, 128
        $region68: #{tpu_custom_call.1} parent=59 // pred_fallthru
          _
        // Predicated region
        $region69: #{tpu_custom_call.1} parent=59 // pred_check
          %p428 = pneg %p141
        $region70: #{tpu_custom_call.1} parent=59 // pred_check_branch
          %430 = sbr.rel (%p428) target = $region72
        $region71: #{tpu_custom_call.1} parent=59 // pred_region
          %431 = dma.done [#allocation6], 512
        $region72: #{tpu_custom_call.1} parent=59 // pred_fallthru
          _
        // Predicated region
        $region73: #{tpu_custom_call.1} parent=59 // pred_check
          %p432 = pneg %p183
        $region74: #{tpu_custom_call.1} parent=59 // pred_check_branch
          %434 = sbr.rel (%p432) target = $region76
        $region75: #{tpu_custom_call.1} parent=59 // pred_region
          %435 = dma.done [#allocation9], 512
        $region76: #{tpu_custom_call.1} parent=59 // pred_fallthru
          _
        %s436 = sand.u32 %s53, 1
        %s437 = scalar_lea.sflag [#allocation3], %s436
        %s438 = sand.u32 %s53, 1
        %s439 = smul.addr %s438, 8
        %s440 = scalar_lea.vmem [#allocation2], %s439
        %p441 = pneg %p66
        %p442 = pneg %p63
        %s443 = sand.u32 %s31, 1
        %s444 = scalar_lea.sflag [#allocation6], %s443
        %s445 = sand.u32 %s79, 1
        %s446 = smul.addr %s445, 8
        %s447 = scalar_lea.vmem [#allocation5], %s446
        %p448 = pneg %p92
        %p449 = pneg %p89
        %p450 = scmp.lt.s32.totalorder %s35, 1
        %s451 = scalar_select %p450, %s35, 1
        %p452 = scmp.lt.s32.totalorder %s36, 0
        %s453 = scalar_select %p452, %s36, 0
        %s454 = smul.addr %s451, 4
        %s455 = sadd.s32 %s453, %s454
        %s456 = smul.addr %s455, 8
        %s457 = scalar_lea.vmem %s2, %s456
        %p458 = pneg %p120
        %p459 = pneg %p117
        %p460 = pneg %p141
        %p461 = pneg %p138
        %p462 = pneg %p162
        %p463 = pneg %p159
        %p464 = pneg %p183
        %p465 = pneg %p180
        %p466 = pneg %p204
        %p467 = pneg %p201
        %p468 = pneg %p225
        %p469 = pneg %p222
        %p470 = pneg %p246
        %p471 = pneg %p243
        %p472 = pneg %p267
        %p473 = pneg %p264
        %p474 = pneg %p295
        %p475 = pneg %p292
        %s476 = sand.u32 %s282, 1
        %s477 = scalar_lea.sflag [#allocation4], %s476
        %s478 = sand.u32 %s282, 1
        %s479 = smul.addr %s478, 8
        %s480 = scalar_lea.vmem [#allocation10], %s479
        %p481 = scmp.lt.s32.totalorder %s35, 1
        %s482 = scalar_select %p481, %s35, 1
        %p483 = scmp.lt.s32.totalorder %s36, 0
        %s484 = scalar_select %p483, %s36, 0
        %s485 = smul.addr %s482, 4
        %s486 = sadd.s32 %s484, %s485
        %s487 = smul.addr %s486, 8
        %s488 = scalar_lea.vmem %s2, %s487
        %v489 = vld [vmem:[%s414] sm:$0xff]
        %v490 = vld [vmem:[%s423] sm:$0xff]
        %v491 = vld [vmem:[#allocation7] sm:$0xff]
        %v492 = vld [vmem:[#allocation7 + $0x8] sm:$0xff]
        %v493 = vld [vmem:[#allocation7 + $0x10] sm:$0xff]
        %v494 = vld [vmem:[#allocation7 + $0x18] sm:$0xff]
        %v495 = vld [vmem:[%s4] sm:$0x1]
        %v497 = vlaneseq
        %v498 = vshrl.u32 %v497, 7
        %v499 = vsub.s32 0, %v498
        %v500 = vrot.slane %v495, %v499
        %vm502 = vcmask 261120
        %v504 = vsel %vm502, %v489, 0
        %506 = vmatprep.subr.mxu0 0.0
        %507 = vmatpush1.msra.mxu0 %v491
        %508 = vmatprep.subr.mxu0 0.0
        %509 = vmatpush1.msra.mxu0 %v492
        %510 = vmatprep.subr.mxu0 0.0
        %511 = vmatpush1.msra.mxu0 %v493
        %512 = vmatprep.subr.mxu0 0.0
        %513 = vmatpush1.msra.mxu0 %v494
        %514 = vmatprep.subr.mxu0 0.0
        %515 = vmatpush1.msra.mxu0 0.0
        %516 = vmatprep.subr.mxu0 0.0
        %517 = vmatpush1.msra.mxu0 0.0
        %518 = vmatprep.subr.mxu0 0.0
        %519 = vmatpush1.msra.mxu0 0.0
        %520 = vmatprep.subr.mxu0 0.0
        %521 = vmatpush1.msra.mxu0 0.0
        %522 = vmatprep.subr.mxu0 0.0
        %523 = vmatpush1.msra.mxu0 0.0
        %524 = vmatprep.subr.mxu0 0.0
        %525 = vmatpush1.msra.mxu0 0.0
        %526 = vmatprep.subr.mxu0 0.0
        %527 = vmatpush1.msra.mxu0 0.0
        %528 = vmatprep.subr.mxu0 0.0
        %529 = vmatpush1.msra.mxu0 0.0
        %530 = vmatprep.subr.mxu0 0.0
        %531 = vmatpush1.msra.mxu0 0.0
        %532 = vmatprep.subr.mxu0 0.0
        %533 = vmatpush1.msra.mxu0 0.0
        %534 = vmatprep.subr.mxu0 0.0
        %535 = vmatpush1.msra.mxu0 0.0
        %536 = vmatprep.subr.mxu0 0.0
        %537 = vmatpush1.msra.mxu0 0.0
        %538 = vmatprep.subr.mxu0 0.0
        %539 = vmatpush1.msra.mxu0 0.0
        %540 = vmatprep.subr.mxu0 0.0
        %541 = vmatpush1.msra.mxu0 0.0
        %542 = vmatprep.subr.mxu0 0.0
        %543 = vmatpush1.msra.mxu0 0.0
        %544 = vmatprep.subr.mxu0 0.0
        %545 = vmatpush1.msra.mxu0 0.0
        %546 = vmatprep.subr.mxu0 0.0
        %547 = vmatpush1.msra.mxu0 0.0
        %548 = vmatprep.subr.mxu0 0.0
        %549 = vmatpush1.msra.mxu0 0.0
        %550 = vmatprep.subr.mxu0 0.0
        %551 = vmatpush1.msra.mxu0 0.0
        %552 = vmatprep.subr.mxu0 0.0
        %553 = vmatpush1.msra.mxu0 0.0
        %554 = vmatprep.subr.mxu0 0.0
        %555 = vmatpush1.msra.mxu0 0.0
        %556 = vmatprep.subr.mxu0 0.0
        %557 = vmatpush1.msra.mxu0 0.0
        %558 = vmatprep.subr.mxu0 0.0
        %559 = vmatpush1.msra.mxu0 0.0
        %560 = vmatprep.subr.mxu0 0.0
        %561 = vmatpush1.msra.mxu0 0.0
        %562 = vmatprep.subr.mxu0 0.0
        %563 = vmatpush1.msra.mxu0 0.0
        %564 = vmatprep.subr.mxu0 0.0
        %565 = vmatpush1.msra.mxu0 0.0
        %566 = vmatprep.subr.mxu0 0.0
        %567 = vmatpush1.msra.mxu0 0.0
        %568 = vmatprep.subr.mxu0 0.0
        %569 = vmatpush1.msra.mxu0 0.0
        %570 = vmatprep.mubr.f32.mxu0 0.0
        %571 = vmatmul.mubr.f32.gmra.mrb[0].mxu0 %v504
        %v572 = vpop.f32.mrb[0].mxu0
        %v573 = vadd.f32 %v500, %v572
        %v574 = vpop.f32.mrb[0].mxu0
        %575 = vdwg.mxu0
        %v576 = vld [vmem:[#allocation8] sm:$0xff]
        %v577 = vld [vmem:[#allocation8 + $0x8] sm:$0xff]
        %v578 = vld [vmem:[#allocation8 + $0x10] sm:$0xff]
        %v579 = vld [vmem:[#allocation8 + $0x18] sm:$0xff]
        %v580 = vld [vmem:[%s6] sm:$0x1]
        %v582 = vlaneseq
        %v583 = vshrl.u32 %v582, 7
        %v584 = vsub.s32 0, %v583
        %v585 = vrot.slane %v580, %v584
        %v588 = vsel %vm502, %v490, 0
        %590 = vmatprep.subr.mxu0 0.0
        %591 = vmatpush1.msra.mxu0 %v576
        %592 = vmatprep.subr.mxu0 0.0
        %593 = vmatpush1.msra.mxu0 %v577
        %594 = vmatprep.subr.mxu0 0.0
        %595 = vmatpush1.msra.mxu0 %v578
        %596 = vmatprep.subr.mxu0 0.0
        %597 = vmatpush1.msra.mxu0 %v579
        %598 = vmatprep.subr.mxu0 0.0
        %599 = vmatpush1.msra.mxu0 0.0
        %600 = vmatprep.subr.mxu0 0.0
        %601 = vmatpush1.msra.mxu0 0.0
        %602 = vmatprep.subr.mxu0 0.0
        %603 = vmatpush1.msra.mxu0 0.0
        %604 = vmatprep.subr.mxu0 0.0
        %605 = vmatpush1.msra.mxu0 0.0
        %606 = vmatprep.subr.mxu0 0.0
        %607 = vmatpush1.msra.mxu0 0.0
        %608 = vmatprep.subr.mxu0 0.0
        %609 = vmatpush1.msra.mxu0 0.0
        %610 = vmatprep.subr.mxu0 0.0
        %611 = vmatpush1.msra.mxu0 0.0
        %612 = vmatprep.subr.mxu0 0.0
        %613 = vmatpush1.msra.mxu0 0.0
        %614 = vmatprep.subr.mxu0 0.0
        %615 = vmatpush1.msra.mxu0 0.0
        %616 = vmatprep.subr.mxu0 0.0
        %617 = vmatpush1.msra.mxu0 0.0
        %618 = vmatprep.subr.mxu0 0.0
        %619 = vmatpush1.msra.mxu0 0.0
        %620 = vmatprep.subr.mxu0 0.0
        %621 = vmatpush1.msra.mxu0 0.0
        %622 = vmatprep.subr.mxu0 0.0
        %623 = vmatpush1.msra.mxu0 0.0
        %624 = vmatprep.subr.mxu0 0.0
        %625 = vmatpush1.msra.mxu0 0.0
        %626 = vmatprep.subr.mxu0 0.0
        %627 = vmatpush1.msra.mxu0 0.0
        %628 = vmatprep.subr.mxu0 0.0
        %629 = vmatpush1.msra.mxu0 0.0
        %630 = vmatprep.subr.mxu0 0.0
        %631 = vmatpush1.msra.mxu0 0.0
        %632 = vmatprep.subr.mxu0 0.0
        %633 = vmatpush1.msra.mxu0 0.0
        %634 = vmatprep.subr.mxu0 0.0
        %635 = vmatpush1.msra.mxu0 0.0
        %636 = vmatprep.subr.mxu0 0.0
        %637 = vmatpush1.msra.mxu0 0.0
        %638 = vmatprep.subr.mxu0 0.0
        %639 = vmatpush1.msra.mxu0 0.0
        %640 = vmatprep.subr.mxu0 0.0
        %641 = vmatpush1.msra.mxu0 0.0
        %642 = vmatprep.subr.mxu0 0.0
        %643 = vmatpush1.msra.mxu0 0.0
        %644 = vmatprep.subr.mxu0 0.0
        %645 = vmatpush1.msra.mxu0 0.0
        %646 = vmatprep.subr.mxu0 0.0
        %647 = vmatpush1.msra.mxu0 0.0
        %648 = vmatprep.subr.mxu0 0.0
        %649 = vmatpush1.msra.mxu0 0.0
        %650 = vmatprep.subr.mxu0 0.0
        %651 = vmatpush1.msra.mxu0 0.0
        %652 = vmatprep.subr.mxu0 0.0
        %653 = vmatpush1.msra.mxu0 0.0
        %654 = vmatprep.mubr.f32.mxu0 0.0
        %655 = vmatmul.mubr.f32.gmra.mrb[0].mxu0 %v588
        %v656 = vpop.f32.mrb[0].mxu0
        %v657 = vadd.f32 %v585, %v656
        %v658 = vpop.f32.mrb[0].mxu0
        %659 = vdwg.mxu0
        %v661 = vsel %vm502, %v573, 0
        %v664 = vsel %vm502, %v657, 0
        %666 = vmatprep.subr.mxu0 0.0
        %667 = vmatpush1.xpose.msra.mxu0 %v664
        %668 = vmatprep.subr.mxu0 0.0
        %669 = vmatpush1.xpose.msra.mxu0 0.0
        %670 = vmatprep.subr.mxu0 0.0
        %671 = vmatpush1.xpose.msra.mxu0 0.0
        %672 = vmatprep.subr.mxu0 0.0
        %673 = vmatpush1.xpose.msra.mxu0 0.0
        %674 = vmatprep.subr.mxu0 0.0
        %675 = vmatpush1.xpose.msra.mxu0 0.0
        %676 = vmatprep.subr.mxu0 0.0
        %677 = vmatpush1.xpose.msra.mxu0 0.0
        %678 = vmatprep.subr.mxu0 0.0
        %679 = vmatpush1.xpose.msra.mxu0 0.0
        %680 = vmatprep.subr.mxu0 0.0
        %681 = vmatpush1.xpose.msra.mxu0 0.0
        %682 = vmatprep.subr.mxu0 0.0
        %683 = vmatpush1.xpose.msra.mxu0 0.0
        %684 = vmatprep.subr.mxu0 0.0
        %685 = vmatpush1.xpose.msra.mxu0 0.0
        %686 = vmatprep.subr.mxu0 0.0
        %687 = vmatpush1.xpose.msra.mxu0 0.0
        %688 = vmatprep.subr.mxu0 0.0
        %689 = vmatpush1.xpose.msra.mxu0 0.0
        %690 = vmatprep.subr.mxu0 0.0
        %691 = vmatpush1.xpose.msra.mxu0 0.0
        %692 = vmatprep.subr.mxu0 0.0
        %693 = vmatpush1.xpose.msra.mxu0 0.0
        %694 = vmatprep.subr.mxu0 0.0
        %695 = vmatpush1.xpose.msra.mxu0 0.0
        %696 = vmatprep.subr.mxu0 0.0
        %697 = vmatpush1.xpose.msra.mxu0 0.0
        %698 = vmatprep.subr.mxu0 0.0
        %699 = vmatpush1.xpose.msra.mxu0 0.0
        %700 = vmatprep.subr.mxu0 0.0
        %701 = vmatpush1.xpose.msra.mxu0 0.0
        %702 = vmatprep.subr.mxu0 0.0
        %703 = vmatpush1.xpose.msra.mxu0 0.0
        %704 = vmatprep.subr.mxu0 0.0
        %705 = vmatpush1.xpose.msra.mxu0 0.0
        %706 = vmatprep.subr.mxu0 0.0
        %707 = vmatpush1.xpose.msra.mxu0 0.0
        %708 = vmatprep.subr.mxu0 0.0
        %709 = vmatpush1.xpose.msra.mxu0 0.0
        %710 = vmatprep.subr.mxu0 0.0
        %711 = vmatpush1.xpose.msra.mxu0 0.0
        %712 = vmatprep.subr.mxu0 0.0
        %713 = vmatpush1.xpose.msra.mxu0 0.0
        %714 = vmatprep.subr.mxu0 0.0
        %715 = vmatpush1.xpose.msra.mxu0 0.0
        %716 = vmatprep.subr.mxu0 0.0
        %717 = vmatpush1.xpose.msra.mxu0 0.0
        %718 = vmatprep.subr.mxu0 0.0
        %719 = vmatpush1.xpose.msra.mxu0 0.0
        %720 = vmatprep.subr.mxu0 0.0
        %721 = vmatpush1.xpose.msra.mxu0 0.0
        %722 = vmatprep.subr.mxu0 0.0
        %723 = vmatpush1.xpose.msra.mxu0 0.0
        %724 = vmatprep.subr.mxu0 0.0
        %725 = vmatpush1.xpose.msra.mxu0 0.0
        %726 = vmatprep.subr.mxu0 0.0
        %727 = vmatpush1.xpose.msra.mxu0 0.0
        %728 = vmatprep.subr.mxu0 0.0
        %729 = vmatpush1.xpose.msra.mxu0 0.0
        %730 = vmatprep.mubr.f32.mxu0 0.0
        %731 = vmatmul.mubr.f32.gmra.mrb[0].mxu0 %v661
        %v732 = vpop.f32.mrb[0].mxu0
        %v733 = vadd.f32 0.0, %v732
        %v734 = vpop.f32.mrb[0].mxu0
        %735 = vdwg.mxu0
        %vm736 = vcmask 64512
        %v737 = vsel %vm736, %v733, -inf
        %738 = vmax.xlane.f32.xlu0 %v737
        %v739 = vpop.xlane.xlu0 %738
        %v740 = vsub.f32 %v733, %v739
        %v741 = vmul.f32 %v740, 1.442695
        %v742 = vpow.pop %v741
        %v743 = vsel %vm736, %v742, 0.0
        %744 = vadd.xlane.f32.xlu0 %v743
        %v745 = vpop.xlane.xlu0 %744
        %v746 = vrcp.pop %v745
        %v747 = vmul.f32 %v742, %v746
        %v749 = vsel %vm736, %v747, 0
        %751 = vmatprep.subr.mxu0 0.0
        %752 = vmatpush1.msra.mxu0 %v490
        %753 = vmatprep.subr.mxu0 0.0
        %754 = vmatpush1.msra.mxu0 0.0
        %755 = vmatprep.subr.mxu0 0.0
        %756 = vmatpush1.msra.mxu0 0.0
        %757 = vmatprep.subr.mxu0 0.0
        %758 = vmatpush1.msra.mxu0 0.0
        %759 = vmatprep.subr.mxu0 0.0
        %760 = vmatpush1.msra.mxu0 0.0
        %761 = vmatprep.subr.mxu0 0.0
        %762 = vmatpush1.msra.mxu0 0.0
        %763 = vmatprep.subr.mxu0 0.0
        %764 = vmatpush1.msra.mxu0 0.0
        %765 = vmatprep.subr.mxu0 0.0
        %766 = vmatpush1.msra.mxu0 0.0
        %767 = vmatprep.subr.mxu0 0.0
        %768 = vmatpush1.msra.mxu0 0.0
        %769 = vmatprep.subr.mxu0 0.0
        %770 = vmatpush1.msra.mxu0 0.0
        %771 = vmatprep.subr.mxu0 0.0
        %772 = vmatpush1.msra.mxu0 0.0
        %773 = vmatprep.subr.mxu0 0.0
        %774 = vmatpush1.msra.mxu0 0.0
        %775 = vmatprep.subr.mxu0 0.0
        %776 = vmatpush1.msra.mxu0 0.0
        %777 = vmatprep.subr.mxu0 0.0
        %778 = vmatpush1.msra.mxu0 0.0
        %779 = vmatprep.subr.mxu0 0.0
        %780 = vmatpush1.msra.mxu0 0.0
        %781 = vmatprep.subr.mxu0 0.0
        %782 = vmatpush1.msra.mxu0 0.0
        %783 = vmatprep.subr.mxu0 0.0
        %784 = vmatpush1.msra.mxu0 0.0
        %785 = vmatprep.subr.mxu0 0.0
        %786 = vmatpush1.msra.mxu0 0.0
        %787 = vmatprep.subr.mxu0 0.0
        %788 = vmatpush1.msra.mxu0 0.0
        %789 = vmatprep.subr.mxu0 0.0
        %790 = vmatpush1.msra.mxu0 0.0
        %791 = vmatprep.subr.mxu0 0.0
        %792 = vmatpush1.msra.mxu0 0.0
        %793 = vmatprep.subr.mxu0 0.0
        %794 = vmatpush1.msra.mxu0 0.0
        %795 = vmatprep.subr.mxu0 0.0
        %796 = vmatpush1.msra.mxu0 0.0
        %797 = vmatprep.subr.mxu0 0.0
        %798 = vmatpush1.msra.mxu0 0.0
        %799 = vmatprep.subr.mxu0 0.0
        %800 = vmatpush1.msra.mxu0 0.0
        %801 = vmatprep.subr.mxu0 0.0
        %802 = vmatpush1.msra.mxu0 0.0
        %803 = vmatprep.subr.mxu0 0.0
        %804 = vmatpush1.msra.mxu0 0.0
        %805 = vmatprep.subr.mxu0 0.0
        %806 = vmatpush1.msra.mxu0 0.0
        %807 = vmatprep.subr.mxu0 0.0
        %808 = vmatpush1.msra.mxu0 0.0
        %809 = vmatprep.subr.mxu0 0.0
        %810 = vmatpush1.msra.mxu0 0.0
        %811 = vmatprep.subr.mxu0 0.0
        %812 = vmatpush1.msra.mxu0 0.0
        %813 = vmatprep.subr.mxu0 0.0
        %814 = vmatpush1.msra.mxu0 0.0
        %815 = vmatprep.mubr.f32.mxu0 0.0
        %816 = vmatmul.mubr.f32.gmra.mrb[0].mxu0 %v749
        %v817 = vpop.f32.mrb[0].mxu0
        %v818 = vadd.f32 0.0, %v817
        %v819 = vpop.f32.mrb[0].mxu0
        %820 = vdwg.mxu0
        %v821 = vld [vmem:[%s7] sm:$0xff]
        %v822 = vld [vmem:[%s7 + $0x8] sm:$0xff]
        %v823 = vld [vmem:[%s7 + $0x10] sm:$0xff]
        %v824 = vld [vmem:[%s7 + $0x18] sm:$0xff]
        %v825 = vld [vmem:[%s8] sm:$0xff]
        %v826 = vld [vmem:[%s8 + $0x8] sm:$0xff]
        %v827 = vld [vmem:[%s8 + $0x10] sm:$0xff]
        %v828 = vld [vmem:[%s8 + $0x18] sm:$0xff]
        %829 = vmatprep.subr.mxu0 0.0
        %830 = vmatpush1.msra.mxu0 %v825
        %831 = vmatprep.subr.mxu0 0.0
        %832 = vmatpush1.msra.mxu0 %v826
        %833 = vmatprep.subr.mxu0 0.0
        %834 = vmatpush1.msra.mxu0 %v827
        %835 = vmatprep.subr.mxu0 0.0
        %836 = vmatpush1.msra.mxu0 %v828
        %837 = vmatprep.subr.mxu0 0.0
        %838 = vmatpush1.msra.mxu0 0.0
        %839 = vmatprep.subr.mxu0 0.0
        %840 = vmatpush1.msra.mxu0 0.0
        %841 = vmatprep.subr.mxu0 0.0
        %842 = vmatpush1.msra.mxu0 0.0
        %843 = vmatprep.subr.mxu0 0.0
        %844 = vmatpush1.msra.mxu0 0.0
        %845 = vmatprep.subr.mxu0 0.0
        %846 = vmatpush1.msra.mxu0 0.0
        %847 = vmatprep.subr.mxu0 0.0
        %848 = vmatpush1.msra.mxu0 0.0
        %849 = vmatprep.subr.mxu0 0.0
        %850 = vmatpush1.msra.mxu0 0.0
        %851 = vmatprep.subr.mxu0 0.0
        %852 = vmatpush1.msra.mxu0 0.0
        %853 = vmatprep.subr.mxu0 0.0
        %854 = vmatpush1.msra.mxu0 0.0
        %855 = vmatprep.subr.mxu0 0.0
        %856 = vmatpush1.msra.mxu0 0.0
        %857 = vmatprep.subr.mxu0 0.0
        %858 = vmatpush1.msra.mxu0 0.0
        %859 = vmatprep.subr.mxu0 0.0
        %860 = vmatpush1.msra.mxu0 0.0
        %861 = vmatprep.subr.mxu0 0.0
        %862 = vmatpush1.msra.mxu0 0.0
        %863 = vmatprep.subr.mxu0 0.0
        %864 = vmatpush1.msra.mxu0 0.0
        %865 = vmatprep.subr.mxu0 0.0
        %866 = vmatpush1.msra.mxu0 0.0
        %867 = vmatprep.subr.mxu0 0.0
        %868 = vmatpush1.msra.mxu0 0.0
        %869 = vmatprep.subr.mxu0 0.0
        %870 = vmatpush1.msra.mxu0 0.0
        %871 = vmatprep.subr.mxu0 0.0
        %872 = vmatpush1.msra.mxu0 0.0
        %873 = vmatprep.subr.mxu0 0.0
        %874 = vmatpush1.msra.mxu0 0.0
        %875 = vmatprep.subr.mxu0 0.0
        %876 = vmatpush1.msra.mxu0 0.0
        %877 = vmatprep.subr.mxu0 0.0
        %878 = vmatpush1.msra.mxu0 0.0
        %879 = vmatprep.subr.mxu0 0.0
        %880 = vmatpush1.msra.mxu0 0.0
        %881 = vmatprep.subr.mxu0 0.0
        %882 = vmatpush1.msra.mxu0 0.0
        %883 = vmatprep.subr.mxu0 0.0
        %884 = vmatpush1.msra.mxu0 0.0
        %885 = vmatprep.subr.mxu0 0.0
        %886 = vmatpush1.msra.mxu0 0.0
        %887 = vmatprep.subr.mxu0 0.0
        %888 = vmatpush1.msra.mxu0 0.0
        %889 = vmatprep.subr.mxu0 0.0
        %890 = vmatpush1.msra.mxu0 0.0
        %891 = vmatprep.subr.mxu0 0.0
        %892 = vmatpush1.msra.mxu0 0.0
        %893 = vmatprep.mubr.f32.mxu0 0.0
        %894 = vmatmul.mubr.f32.gmra.mrb[0].mxu0 %v504
        %v895 = vpop.f32.mrb[0].mxu0
        %v896 = vadd.f32 0.0, %v895
        %v897 = vpop.f32.mrb[0].mxu0
        %898 = vdwg.mxu0
        %v900 = vsel %vm502, %v818, 0
        %902 = vmatprep.subr.mxu0 0.0
        %903 = vmatpush1.msra.mxu0 %v821
        %904 = vmatprep.subr.mxu0 0.0
        %905 = vmatpush1.msra.mxu0 %v822
        %906 = vmatprep.subr.mxu0 0.0
        %907 = vmatpush1.msra.mxu0 %v823
        %908 = vmatprep.subr.mxu0 0.0
        %909 = vmatpush1.msra.mxu0 %v824
        %910 = vmatprep.subr.mxu0 0.0
        %911 = vmatpush1.msra.mxu0 0.0
        %912 = vmatprep.subr.mxu0 0.0
        %913 = vmatpush1.msra.mxu0 0.0
        %914 = vmatprep.subr.mxu0 0.0
        %915 = vmatpush1.msra.mxu0 0.0
        %916 = vmatprep.subr.mxu0 0.0
        %917 = vmatpush1.msra.mxu0 0.0
        %918 = vmatprep.subr.mxu0 0.0
        %919 = vmatpush1.msra.mxu0 0.0
        %920 = vmatprep.subr.mxu0 0.0
        %921 = vmatpush1.msra.mxu0 0.0
        %922 = vmatprep.subr.mxu0 0.0
        %923 = vmatpush1.msra.mxu0 0.0
        %924 = vmatprep.subr.mxu0 0.0
        %925 = vmatpush1.msra.mxu0 0.0
        %926 = vmatprep.subr.mxu0 0.0
        %927 = vmatpush1.msra.mxu0 0.0
        %928 = vmatprep.subr.mxu0 0.0
        %929 = vmatpush1.msra.mxu0 0.0
        %930 = vmatprep.subr.mxu0 0.0
        %931 = vmatpush1.msra.mxu0 0.0
        %932 = vmatprep.subr.mxu0 0.0
        %933 = vmatpush1.msra.mxu0 0.0
        %934 = vmatprep.subr.mxu0 0.0
        %935 = vmatpush1.msra.mxu0 0.0
        %936 = vmatprep.subr.mxu0 0.0
        %937 = vmatpush1.msra.mxu0 0.0
        %938 = vmatprep.subr.mxu0 0.0
        %939 = vmatpush1.msra.mxu0 0.0
        %940 = vmatprep.subr.mxu0 0.0
        %941 = vmatpush1.msra.mxu0 0.0
        %942 = vmatprep.subr.mxu0 0.0
        %943 = vmatpush1.msra.mxu0 0.0
        %944 = vmatprep.subr.mxu0 0.0
        %945 = vmatpush1.msra.mxu0 0.0
        %946 = vmatprep.subr.mxu0 0.0
        %947 = vmatpush1.msra.mxu0 0.0
        %948 = vmatprep.subr.mxu0 0.0
        %949 = vmatpush1.msra.mxu0 0.0
        %950 = vmatprep.subr.mxu0 0.0
        %951 = vmatpush1.msra.mxu0 0.0
        %952 = vmatprep.subr.mxu0 0.0
        %953 = vmatpush1.msra.mxu0 0.0
        %954 = vmatprep.subr.mxu0 0.0
        %955 = vmatpush1.msra.mxu0 0.0
        %956 = vmatprep.subr.mxu0 0.0
        %957 = vmatpush1.msra.mxu0 0.0
        %958 = vmatprep.subr.mxu0 0.0
        %959 = vmatpush1.msra.mxu0 0.0
        %960 = vmatprep.subr.mxu0 0.0
        %961 = vmatpush1.msra.mxu0 0.0
        %962 = vmatprep.subr.mxu0 0.0
        %963 = vmatpush1.msra.mxu0 0.0
        %964 = vmatprep.subr.mxu0 0.0
        %965 = vmatpush1.msra.mxu0 0.0
        %966 = vmatprep.mubr.f32.mxu0 0.0
        %967 = vmatmul.mubr.f32.gmra.mrb[0].mxu0 %v900
        %v968 = vpop.f32.mrb[0].mxu0
        %v969 = vadd.f32 %v896, %v968
        %v970 = vpop.f32.mrb[0].mxu0
        %971 = vdwg.mxu0
        %v972 = vld [vmem:[%s9] sm:$0x1]
        %974 = vset.pattern.permute.xlu0 0
        %975 = vperm.xlu0 %974, %v969
        %v976 = vpop.permute.xlu0 %975
        %v978 = vlaneseq
        %v979 = vshrl.u32 %v978, 7
        %v980 = vsub.s32 0, %v979
        %v981 = vrot.slane %v972, %v980
        %v982 = vmul.f32 %v976, %v981
        %v983 = vld [vmem:[%s488] sm:$0xff]
        %v984 = vmul.f32 %v982, %v983
        %v985 = vadd.f32 %v984, 0.0
        %v986 = vld [vmem:[%s9 + $0x1] sm:$0x1]
        %987 = vset.pattern.permute.xlu0 1
        %988 = vperm.xlu0 %987, %v969
        %v989 = vpop.permute.xlu0 %988
        %v991 = vlaneseq
        %v992 = vshrl.u32 %v991, 7
        %v993 = vsub.s32 0, %v992
        %v994 = vrot.slane %v986, %v993
        %v995 = vmul.f32 %v989, %v994
        %s996 = scalar_lea.vmem %s488, 8
        %v997 = vld [vmem:[%s996] sm:$0xff]
        %v998 = vmul.f32 %v995, %v997
        %v999 = vadd.f32 %v985, %v998
        %v1000 = vld [vmem:[%s9 + $0x2] sm:$0x1]
        %1001 = vset.pattern.permute.xlu0 2
        %1002 = vperm.xlu0 %1001, %v969
        %v1003 = vpop.permute.xlu0 %1002
        %v1005 = vlaneseq
        %v1006 = vshrl.u32 %v1005, 7
        %v1007 = vsub.s32 0, %v1006
        %v1008 = vrot.slane %v1000, %v1007
        %v1009 = vmul.f32 %v1003, %v1008
        %s1010 = scalar_lea.vmem %s488, 16
        %v1011 = vld [vmem:[%s1010] sm:$0xff]
        %v1012 = vmul.f32 %v1009, %v1011
        %v1013 = vadd.f32 %v999, %v1012
        %v1014 = vld [vmem:[%s9 + $0x3] sm:$0x1]
        %1015 = vset.pattern.permute.xlu0 3
        %1016 = vperm.xlu0 %1015, %v969
        %v1017 = vpop.permute.xlu0 %1016
        %v1019 = vlaneseq
        %v1020 = vshrl.u32 %v1019, 7
        %v1021 = vsub.s32 0, %v1020
        %v1022 = vrot.slane %v1014, %v1021
        %v1023 = vmul.f32 %v1017, %v1022
        %s1024 = scalar_lea.vmem %s488, 24
        %v1025 = vld [vmem:[%s1024] sm:$0xff]
        %v1026 = vmul.f32 %v1023, %v1025
        %v1027 = vadd.f32 %v1013, %v1026
        %1028 = vst.msk [vmem:[%s480] sm:$0xff] %vm502, %v1027
        %s1029 = sand.u32 %s282, 1
        %s1030 = scalar_lea.sflag [#allocation4], %s1029
        %s1031 = sand.u32 %s282, 1
        %s1032 = smul.addr %s1031, 8
        %s1033 = scalar_lea.vmem [#allocation10], %s1032
        // Predicated region
        $region77: #{tpu_custom_call.1} parent=59 // pred_check
          %p1034 = pneg %p292
        $region78: #{tpu_custom_call.1} parent=59 // pred_check_branch
          %1036 = sbr.rel (%p1034) target = $region80
        $region79: #{tpu_custom_call.1} parent=59 // pred_region
          %s1038 = ssub.s32 128, 128
          %1039 = vsyncadd %s1030, %s1038
          %s1040 = sadd.s32 %s36, %s35
          %s1041 = smul.addr %s1040, 128
          %s1042 = scalar_lea.hbm %s10, %s1041
          %s1044 = sshll.u32 %s1033, 4
          %s1045 = int_to_ptr.vmem [resolvable:$true] %s1044
          %1047 = dma.vmem_to_hbm [thread:$0]  %s1045, 128, %s1042, %s1030
        $region80: #{tpu_custom_call.1} parent=59 // pred_fallthru
          _
      $region60: #{tpu_custom_call.1} parent=5 // pred_fallthru
        _
      %p1048 = scmp.le.s32.totalorder 2, %s26
      // Predicated region
      $region81: #{tpu_custom_call.1} parent=5 // pred_check
        %p1049 = pneg %p1048
      $region82: #{tpu_custom_call.1} parent=5 // pred_check_branch
        %1051 = sbr.rel (%p1049) target = $region84
      $region83: #{tpu_custom_call.1} parent=5 // pred_region
        %s1052 = ssub.s32 %s26, 2
        // Predicated region
        $region85: #{tpu_custom_call.1} parent=83 // pred_check
          %p1053 = pneg %p298
        $region86: #{tpu_custom_call.1} parent=83 // pred_check_branch
          %1055 = sbr.rel (%p1053) target = $region88
        $region87: #{tpu_custom_call.1} parent=83 // pred_region
          %s1056 = sand.u32 %s283, 1
          %s1057 = scalar_lea.sflag [#allocation4], %s1056
          %s1058 = sand.u32 %s283, 1
          %s1059 = smul.addr %s1058, 8
          %s1060 = scalar_lea.vmem [#allocation10], %s1059
          %1061 = dma.done %s1057, 128
        $region88: #{tpu_custom_call.1} parent=83 // pred_fallthru
          _
      $region84: #{tpu_custom_call.1} parent=5 // pred_fallthru
        _
    $region6: #{tpu_custom_call.1} parent=1 // loop_footer
      %s30 = sadd.s32 1, %s26
    $region7: #{tpu_custom_call.1} parent=1 // loop_footer_branch
      %25 = sbr.rel target = $region3
    $region8: #{tpu_custom_call.1} parent=1 // loop_exit
      _
    %1062 = vsyncpa [#allocation3], 1
    %s1063 = scalar_lea.sflag [#allocation3], 1
    %1064 = vsyncpa %s1063, 1
    %1065 = vsyncpa [#allocation6], 1
    %s1066 = scalar_lea.sflag [#allocation6], 1
    %1067 = vsyncpa %s1066, 1
    %1068 = vsyncpa [#allocation9], 1
    %1069 = vsyncpa [#allocation4], 1
    %s1070 = scalar_lea.sflag [#allocation4], 1
    %1071 = vsyncpa %s1070, 1

</llo_original>
